<compile_context>
chip_gen: v5e
topology: v5e:2x2
jax: 0.10.0
libtpu: 0.0.40
codegen_flags: <defaults>
</compile_context>

<pallas_src>
import jax
import jax.numpy as jnp
from jax.experimental import pallas as pl
from jax.experimental.pallas import tpu as pltpu

_SUBLANE = 8


def _round_up(x, m):
    return -(-x // m) * m


def _num_tensorcores():
    """Best-effort TensorCores-per-chip (2 on v7x, 1 on v5e/v6e). Safe fallback: 1."""
    try:
        info = pltpu.get_tpu_info()
        for name in ("tensorcores_per_chip", "num_tensorcores", "num_cores",
                     "core_count"):
            v = getattr(info, name, None)
            if isinstance(v, int) and v > 0:
                return min(v, 2)
    except Exception:
        pass
    try:
        v = getattr(jax.devices()[0], "num_cores", None)
        if isinstance(v, int) and v > 0:
            return min(v, 2)
    except Exception:
        pass
    return 1


def _choose_tile(batch, tile_b, max_tile_rows, num_cores):
    """Pick (tile_rows, grid_steps): as few steps as possible, but a multiple of
    num_cores (so 'parallel' can shard across v7x's 2 TCs) and within the VMEM cap."""
    rows = _round_up(max(batch, _SUBLANE), _SUBLANE)
    max_tile_rows = _round_up(max(max_tile_rows, _SUBLANE), _SUBLANE)
    if tile_b is not None:
        tile = _round_up(min(max(tile_b, _SUBLANE), rows), _SUBLANE)
        steps = pl.cdiv(rows, tile)
    else:
        steps = max(1, pl.cdiv(rows, max_tile_rows))
        if num_cores > 1:
            steps = _round_up(steps, num_cores)
        tile = _round_up(pl.cdiv(rows, steps), _SUBLANE)
    return tile, steps


def ddpg_actor_kernel(x_ref,
                      w1_ref, b1_ref,
                      w2_ref, b2_ref,
                      w3_ref, b3_ref,
                      w4_ref, b4_ref,
                      out_ref):
    """One grid step: full 4-layer MLP on a (TILE_B, n_states) batch tile."""
    wdt = w1_ref.dtype  # weights may be bf16; only MXU operands are cast.

    def to_wdt(h):
        return h.astype(wdt) if h.dtype != wdt else h

    def dense(h, w_ref, b_ref):
        # f32 accumulation on the MXU, bias-add in f32 on the VPU.
        return jnp.dot(h, w_ref[...], preferred_element_type=jnp.float32) + b_ref[...]

    h = to_wdt(x_ref[...])                               # cast input tile once
    h = jnp.maximum(dense(h, w1_ref, b1_ref), 0.0)
    h = to_wdt(h)
    h = jnp.maximum(dense(h, w2_ref, b2_ref), 0.0)
    h = to_wdt(h)
    h = jnp.maximum(dense(h, w3_ref, b3_ref), 0.0)
    h = to_wdt(h)
    out_ref[...] = jnp.tanh(dense(h, w4_ref, b4_ref)).astype(out_ref.dtype)


def ddpg_actor_forward(x, params, *, tile_b=None, max_tile_rows=4096,
                       weight_dtype=None, num_cores=None):
    """DDPGActor forward with one pallas_call.

    x: (batch, n_states) float32
    params: dict w1..w4 / b1..b4; weights stored (in, out), biases (1, out).
    tile_b: optional explicit batch tile (rounded to a multiple of 8). Default:
            auto -- one tile per TensorCore, capped at max_tile_rows.
    weight_dtype: optional narrow dtype for the matmul weights (e.g. jnp.bfloat16,
            sensible on v6e/v7x; keep the f32 default on v5e).
    num_cores: override TensorCore count used for grid sharding (auto-detected).
    """
    batch, n_states = x.shape
    n_hidden = params["w1"].shape[1]
    n_actions = params["w4"].shape[1]

    wdt = jnp.dtype(weight_dtype) if weight_dtype is not None else params["w1"].dtype
    if num_cores is None:
        num_cores = _num_tensorcores()

    # --- batch tiling: fewest possible grid steps, padded batch = tile * steps.
    tile, steps = _choose_tile(batch, tile_b, max_tile_rows, num_cores)
    batch_p = tile * steps
    xp = x if batch_p == batch else jnp.pad(x, ((0, batch_p - batch), (0, 0)))

    w1 = params["w1"].astype(wdt)
    w2 = params["w2"].astype(wdt)
    w3 = params["w3"].astype(wdt)
    w4 = params["w4"].astype(wdt)
    b1, b2, b3, b4 = params["b1"], params["b2"], params["b3"], params["b4"]  # f32

    def batch_tile_map(i):      # tiles that march over the batch grid
        return (i, 0)

    def resident_map(i):        # weights/biases: same block every step -> VMEM-resident
        return (0, 0)

    in_specs = [pl.BlockSpec((tile, n_states), batch_tile_map)] + [
        pl.BlockSpec(a.shape, resident_map)
        for a in (w1, b1, w2, b2, w3, b3, w4, b4)
    ]
    # Unpadded, narrow output block (lane dim == full array dim): 16 B/row of HBM
    # writeback instead of 512 B/row with a 128-lane padded slab.
    out_spec = pl.BlockSpec((tile, n_actions), batch_tile_map)

    flops = 2 * batch_p * (n_states * n_hidden
                           + 2 * n_hidden * n_hidden
                           + n_hidden * n_actions)
    weight_bytes = sum(int(a.size) * a.dtype.itemsize
                       for a in (w1, b1, w2, b2, w3, b3, w4, b4))
    bytes_accessed = (int(xp.size) * xp.dtype.itemsize
                      + weight_bytes
                      + batch_p * n_actions * 4)

    out = pl.pallas_call(
        ddpg_actor_kernel,
        out_shape=jax.ShapeDtypeStruct((batch_p, n_actions), jnp.float32),
        grid=(steps,),
        in_specs=in_specs,
        out_specs=out_spec,
        compiler_params=pltpu.CompilerParams(
            dimension_semantics=("parallel",),
            vmem_limit_bytes=48 * 1024 * 1024),
        cost_estimate=pl.CostEstimate(
            flops=flops,
            transcendentals=batch_p * n_actions,
            bytes_accessed=bytes_accessed),
    )(xp, w1, b1, w2, b2, w3, b3, w4, b4)

    return out[:batch, :]


def init_params(key, n_states, n_actions, n_hidden):
    """Deterministic init mimicking PyTorch nn.Linear defaults:
    U(-1/sqrt(fan_in), 1/sqrt(fan_in)) for both weight and bias."""
    dims = [(n_states, n_hidden),
            (n_hidden, n_hidden),
            (n_hidden, n_hidden),
            (n_hidden, n_actions)]
    params = {}
    keys = jax.random.split(key, 2 * len(dims))
    for i, (fan_in, fan_out) in enumerate(dims):
        bound = 1.0 / jnp.sqrt(jnp.float32(fan_in))
        params[f"w{i + 1}"] = jax.random.uniform(
            keys[2 * i], (fan_in, fan_out),
            minval=-bound, maxval=bound, dtype=jnp.float32)
        params[f"b{i + 1}"] = jax.random.uniform(
            keys[2 * i + 1], (1, fan_out),
            minval=-bound, maxval=bound, dtype=jnp.float32)
    return params


def reference_forward(x, params):
    h = jax.nn.relu(x @ params["w1"] + params["b1"])
    h = jax.nn.relu(h @ params["w2"] + params["b2"])
    h = jax.nn.relu(h @ params["w3"] + params["b3"])
    return jnp.tanh(h @ params["w4"] + params["b4"])


# TODO(synk): the Adam optimizer and device/Tensor-conversion plumbing in the
# PyTorch module are host-side concerns with no Pallas equivalent.

if __name__ == "__main__":
    key = jax.random.PRNGKey(0)
    k_x, k_p, k_x2 = jax.random.split(key, 3)

    n_states, n_actions, n_hidden = 16, 4, 32
    params = init_params(k_p, n_states, n_actions, n_hidden)

    # Small batch (not a multiple of 8) exercises the sublane-padding path.
    x_small = jax.random.normal(k_x, (20, n_states), dtype=jnp.float32)
    out_small = jax.block_until_ready(ddpg_actor_forward(x_small, params))
    ref_small = reference_forward(x_small, params)
    assert out_small.shape == (20, n_actions)
    assert jnp.allclose(out_small, ref_small, atol=1e-5, rtol=1e-5), "f32 small-batch mismatch"

    # Larger batch with auto tiling: grid collapses to num_cores step(s).
    x_big = jax.random.normal(k_x2, (512, n_states), dtype=jnp.float32)
    out_big = jax.block_until_ready(ddpg_actor_forward(x_big, params))
    ref_big = reference_forward(x_big, params)
    assert out_big.shape == (512, n_actions)
    assert jnp.allclose(out_big, ref_big, atol=1e-5, rtol=1e-5), "f32 auto-tile mismatch"

    # Explicit small tile exercises the multi-step pipelined ("parallel") grid.
    out_tiled = jax.block_until_ready(ddpg_actor_forward(x_big, params, tile_b=128))
    assert jnp.allclose(out_tiled, ref_big, atol=1e-5, rtol=1e-5), "f32 gridded mismatch"

    # Opt-in bf16-weight path (MXU-native on v6e/v7x); f32 accumulation + f32 elementwise.
    out_bf16 = jax.block_until_ready(
        ddpg_actor_forward(x_big, params, weight_dtype=jnp.bfloat16))
    assert jnp.allclose(out_bf16, ref_big, atol=5e-2, rtol=0.0), "bf16 path mismatch"

    print("KERNEL_OK")
</pallas_src>

<mosaic_0001>
module attributes {stable_mosaic.version = 11 : i64} {
  func.func @ddpg_actor_kernel(%arg0: i32, %arg1: memref<24x16xf32, #tpu.memory_space<vmem>>, %arg2: memref<16x32xf32, #tpu.memory_space<vmem>>, %arg3: memref<1x32xf32, #tpu.memory_space<vmem>>, %arg4: memref<32x32xf32, #tpu.memory_space<vmem>>, %arg5: memref<1x32xf32, #tpu.memory_space<vmem>>, %arg6: memref<32x32xf32, #tpu.memory_space<vmem>>, %arg7: memref<1x32xf32, #tpu.memory_space<vmem>>, %arg8: memref<32x4xf32, #tpu.memory_space<vmem>>, %arg9: memref<1x4xf32, #tpu.memory_space<vmem>>, %arg10: memref<24x4xf32, #tpu.memory_space<vmem>>) attributes {dimension_semantics = [#tpu.dimension_semantics<parallel>], iteration_bounds = array<i64: 1>, scalar_prefetch = 0 : i64, scratch_operands = 0 : i64, tpu.core_type = #tpu.core_type<tc>, window_params = [{transform_indices = @transform_0, window_bounds = array<i64: 24, 16>}, {pipeline_mode = #tpu.pipeline_mode<synchronous>, transform_indices = @transform_1, window_bounds = array<i64: 16, 32>}, {pipeline_mode = #tpu.pipeline_mode<synchronous>, transform_indices = @transform_2, window_bounds = array<i64: 1, 32>}, {pipeline_mode = #tpu.pipeline_mode<synchronous>, transform_indices = @transform_3, window_bounds = array<i64: 32, 32>}, {pipeline_mode = #tpu.pipeline_mode<synchronous>, transform_indices = @transform_4, window_bounds = array<i64: 1, 32>}, {pipeline_mode = #tpu.pipeline_mode<synchronous>, transform_indices = @transform_5, window_bounds = array<i64: 32, 32>}, {pipeline_mode = #tpu.pipeline_mode<synchronous>, transform_indices = @transform_6, window_bounds = array<i64: 1, 32>}, {pipeline_mode = #tpu.pipeline_mode<synchronous>, transform_indices = @transform_7, window_bounds = array<i64: 32, 4>}, {pipeline_mode = #tpu.pipeline_mode<synchronous>, transform_indices = @transform_8, window_bounds = array<i64: 1, 4>}, {transform_indices = @transform_9, window_bounds = array<i64: 24, 4>}]} {
    %c0 = arith.constant 0 : index
    %c0_0 = arith.constant 0 : index
    %0 = vector.load %arg1[%c0, %c0_0] : memref<24x16xf32, #tpu.memory_space<vmem>>, vector<24x16xf32>
    %c0_1 = arith.constant 0 : index
    %c0_2 = arith.constant 0 : index
    %1 = vector.load %arg2[%c0_1, %c0_2] : memref<16x32xf32, #tpu.memory_space<vmem>>, vector<16x32xf32>
    %cst = arith.constant dense<0.000000e+00> : vector<24x32xf32>
    %2 = tpu.matmul %0, %1, %cst {dimension_numbers = #tpu.dot_dimension_numbers<[1], [0], [0], [1], [0, 0, 1, 1], [], []>} : vector<24x16xf32>, vector<16x32xf32>, vector<24x32xf32> -> vector<24x32xf32>
    %c0_3 = arith.constant 0 : index
    %c0_4 = arith.constant 0 : index
    %3 = vector.load %arg3[%c0_3, %c0_4] : memref<1x32xf32, #tpu.memory_space<vmem>>, vector<1x32xf32>
    %4 = vector.broadcast %3 : vector<1x32xf32> to vector<24x32xf32>
    %5 = arith.addf %2, %4 : vector<24x32xf32>
    %cst_5 = arith.constant 0.000000e+00 : f32
    %6 = vector.broadcast %cst_5 : f32 to vector<24x32xf32>
    %7 = arith.maximumf %5, %6 : vector<24x32xf32>
    %c0_6 = arith.constant 0 : index
    %c0_7 = arith.constant 0 : index
    %8 = vector.load %arg4[%c0_6, %c0_7] : memref<32x32xf32, #tpu.memory_space<vmem>>, vector<32x32xf32>
    %cst_8 = arith.constant dense<0.000000e+00> : vector<24x32xf32>
    %9 = tpu.matmul %7, %8, %cst_8 {dimension_numbers = #tpu.dot_dimension_numbers<[1], [0], [0], [1], [0, 0, 1, 1], [], []>} : vector<24x32xf32>, vector<32x32xf32>, vector<24x32xf32> -> vector<24x32xf32>
    %c0_9 = arith.constant 0 : index
    %c0_10 = arith.constant 0 : index
    %10 = vector.load %arg5[%c0_9, %c0_10] : memref<1x32xf32, #tpu.memory_space<vmem>>, vector<1x32xf32>
    %11 = vector.broadcast %10 : vector<1x32xf32> to vector<24x32xf32>
    %12 = arith.addf %9, %11 : vector<24x32xf32>
    %cst_11 = arith.constant 0.000000e+00 : f32
    %13 = vector.broadcast %cst_11 : f32 to vector<24x32xf32>
    %14 = arith.maximumf %12, %13 : vector<24x32xf32>
    %c0_12 = arith.constant 0 : index
    %c0_13 = arith.constant 0 : index
    %15 = vector.load %arg6[%c0_12, %c0_13] : memref<32x32xf32, #tpu.memory_space<vmem>>, vector<32x32xf32>
    %cst_14 = arith.constant dense<0.000000e+00> : vector<24x32xf32>
    %16 = tpu.matmul %14, %15, %cst_14 {dimension_numbers = #tpu.dot_dimension_numbers<[1], [0], [0], [1], [0, 0, 1, 1], [], []>} : vector<24x32xf32>, vector<32x32xf32>, vector<24x32xf32> -> vector<24x32xf32>
    %c0_15 = arith.constant 0 : index
    %c0_16 = arith.constant 0 : index
    %17 = vector.load %arg7[%c0_15, %c0_16] : memref<1x32xf32, #tpu.memory_space<vmem>>, vector<1x32xf32>
    %18 = vector.broadcast %17 : vector<1x32xf32> to vector<24x32xf32>
    %19 = arith.addf %16, %18 : vector<24x32xf32>
    %cst_17 = arith.constant 0.000000e+00 : f32
    %20 = vector.broadcast %cst_17 : f32 to vector<24x32xf32>
    %21 = arith.maximumf %19, %20 : vector<24x32xf32>
    %c0_18 = arith.constant 0 : index
    %c0_19 = arith.constant 0 : index
    %22 = vector.load %arg8[%c0_18, %c0_19] : memref<32x4xf32, #tpu.memory_space<vmem>>, vector<32x4xf32>
    %cst_20 = arith.constant dense<0.000000e+00> : vector<24x4xf32>
    %23 = tpu.matmul %21, %22, %cst_20 {dimension_numbers = #tpu.dot_dimension_numbers<[1], [0], [0], [1], [0, 0, 1, 1], [], []>} : vector<24x32xf32>, vector<32x4xf32>, vector<24x4xf32> -> vector<24x4xf32>
    %c0_21 = arith.constant 0 : index
    %c0_22 = arith.constant 0 : index
    %24 = vector.load %arg9[%c0_21, %c0_22] : memref<1x4xf32, #tpu.memory_space<vmem>>, vector<1x4xf32>
    %25 = vector.broadcast %24 : vector<1x4xf32> to vector<24x4xf32>
    %26 = arith.addf %23, %25 : vector<24x4xf32>
    %27 = math.tanh %26 : vector<24x4xf32>
    %c0_23 = arith.constant 0 : index
    %c0_24 = arith.constant 0 : index
    %28 = vector.load %arg10[%c0_23, %c0_24] : memref<24x4xf32, #tpu.memory_space<vmem>>, vector<24x4xf32>
    tpu.vector_store %arg10[%c0_23, %c0_24], %27 {strides = array<i32>} : memref<24x4xf32, #tpu.memory_space<vmem>>, vector<24x4xf32>,
    return
  }
  func.func @transform_0(%arg0: i32) -> (i32, i32) {
    %c0_i32 = arith.constant 0 : i32
    %c0_i32_0 = arith.constant 0 : i32
    return %arg0, %c0_i32 : i32, i32
  }
  func.func @transform_1(%arg0: i32) -> (i32, i32) {
    %c0_i32 = arith.constant 0 : i32
    %c0_i32_0 = arith.constant 0 : i32
    %c0_i32_1 = arith.constant 0 : i32
    return %c0_i32, %c0_i32_0 : i32, i32
  }
  func.func @transform_2(%arg0: i32) -> (i32, i32) {
    %c0_i32 = arith.constant 0 : i32
    %c0_i32_0 = arith.constant 0 : i32
    %c0_i32_1 = arith.constant 0 : i32
    return %c0_i32, %c0_i32_0 : i32, i32
  }
  func.func @transform_3(%arg0: i32) -> (i32, i32) {
    %c0_i32 = arith.constant 0 : i32
    %c0_i32_0 = arith.constant 0 : i32
    %c0_i32_1 = arith.constant 0 : i32
    return %c0_i32, %c0_i32_0 : i32, i32
  }
  func.func @transform_4(%arg0: i32) -> (i32, i32) {
    %c0_i32 = arith.constant 0 : i32
    %c0_i32_0 = arith.constant 0 : i32
    %c0_i32_1 = arith.constant 0 : i32
    return %c0_i32, %c0_i32_0 : i32, i32
  }
  func.func @transform_5(%arg0: i32) -> (i32, i32) {
    %c0_i32 = arith.constant 0 : i32
    %c0_i32_0 = arith.constant 0 : i32
    %c0_i32_1 = arith.constant 0 : i32
    return %c0_i32, %c0_i32_0 : i32, i32
  }
  func.func @transform_6(%arg0: i32) -> (i32, i32) {
    %c0_i32 = arith.constant 0 : i32
    %c0_i32_0 = arith.constant 0 : i32
    %c0_i32_1 = arith.constant 0 : i32
    return %c0_i32, %c0_i32_0 : i32, i32
  }
  func.func @transform_7(%arg0: i32) -> (i32, i32) {
    %c0_i32 = arith.constant 0 : i32
    %c0_i32_0 = arith.constant 0 : i32
    %c0_i32_1 = arith.constant 0 : i32
    return %c0_i32, %c0_i32_0 : i32, i32
  }
  func.func @transform_8(%arg0: i32) -> (i32, i32) {
    %c0_i32 = arith.constant 0 : i32
    %c0_i32_0 = arith.constant 0 : i32
    %c0_i32_1 = arith.constant 0 : i32
    return %c0_i32, %c0_i32_0 : i32, i32
  }
  func.func @transform_9(%arg0: i32) -> (i32, i32) {
    %c0_i32 = arith.constant 0 : i32
    %c0_i32_0 = arith.constant 0 : i32
    return %arg0, %c0_i32 : i32, i32
  }
}

</mosaic_0001>

<llo_original>
// kernel: tpu_custom_call.1
$region0: #{tpu_custom_call.1}
  #allocation0 [shape = 'u32[]', space=smem, size = 0x4, offset = 0x4, fixed_abs, tag = 'smem constant byte address 0x4 - core index']
  #allocation1 [shape = 'u32[72,128]{1,0:T(1,128)}', space=vmem, size = 0x9000, scoped, tag = 'internal scratch']
  %s0 = inlined_call_operand.vmem [shape: f32[24,16], index: 0, kind: input, shape index: {}]
  %s1 = inlined_call_operand.hbm [shape: f32[16,32], index: 1, kind: input, shape index: {}]
  %s2 = inlined_call_operand.vmem [shape: f32[1,32], index: 2, kind: input, shape index: {}]
  %s3 = inlined_call_operand.vmem [shape: f32[32,32], index: 3, kind: input, shape index: {}]
  %s4 = inlined_call_operand.vmem [shape: f32[1,32], index: 4, kind: input, shape index: {}]
  %s5 = inlined_call_operand.vmem [shape: f32[32,32], index: 5, kind: input, shape index: {}]
  %s6 = inlined_call_operand.vmem [shape: f32[1,32], index: 6, kind: input, shape index: {}]
  %s7 = inlined_call_operand.vmem [shape: f32[32,4], index: 7, kind: input, shape index: {}]
  %s8 = inlined_call_operand.vmem [shape: f32[1,4], index: 8, kind: input, shape index: {}]
  %s9 = inlined_call_operand.vmem [shape: f32[24,4], index: 9, kind: output, shape index: {}]
  %s10 = sld [smem:[#allocation0]]
  $region50: #{tpu_custom_call.1} parent=0
    _
  %s12 = ssub.s32 1, %s10
  %s13 = scalar_select 0, %s12, %s10
  $region1: #{tpu_custom_call.1} parent=0
    #allocation2 [shape = 'u8[8192]{0}', space=vmem, size = 0x2000, scoped, tag = 'input window, operand 1, single buffered']
    #allocation3 [shape = 's32[1]{0}', space=sflag, size = 0x4, scoped, tag = 'scoped memory for tpu_custom_call.1']
    %14 = vsyncpa [#allocation3], 0
    // Predicated region
    $region2: #{tpu_custom_call.1} parent=1 // pred_check
      _
    $region3: #{tpu_custom_call.1} parent=1 // pred_check_branch
      %16 = sbr.rel (0) target = $region5
    $region4: #{tpu_custom_call.1} parent=1 // pred_region
      _
    $region5: #{tpu_custom_call.1} parent=1 // pred_fallthru
      _
    // Predicated region
    $region6: #{tpu_custom_call.1} parent=1 // pred_check
      _
    $region7: #{tpu_custom_call.1} parent=1 // pred_check_branch
      %18 = sbr.rel (0) target = $region9
    $region8: #{tpu_custom_call.1} parent=1 // pred_region
      %20 = vsyncadd [#allocation3], 0
      %s21 = sshll.u32 %s1, 4
      %s22 = int_to_ptr.hbm [resolvable:$true] %s21
      %s23 = sshll.u32 [#allocation2], 4
      %s24 = int_to_ptr.vmem [resolvable:$true] %s23
      %29 = dma.hbm_to_vmem [thread:$0]  %s22, 256, %s24, [#allocation3], 128, 128, 8
    $region9: #{tpu_custom_call.1} parent=1 // pred_fallthru
      _
    // Predicated region
    $region10: #{tpu_custom_call.1} parent=1 // pred_check
      _
    $region11: #{tpu_custom_call.1} parent=1 // pred_check_branch
      %31 = sbr.rel (0) target = $region13
    $region12: #{tpu_custom_call.1} parent=1 // pred_region
      _
    $region13: #{tpu_custom_call.1} parent=1 // pred_fallthru
      _
    // Predicated region
    $region14: #{tpu_custom_call.1} parent=1 // pred_check
      _
    $region15: #{tpu_custom_call.1} parent=1 // pred_check_branch
      %33 = sbr.rel (0) target = $region17
    $region16: #{tpu_custom_call.1} parent=1 // pred_region
      _
    $region17: #{tpu_custom_call.1} parent=1 // pred_fallthru
      _
    // Predicated region
    $region18: #{tpu_custom_call.1} parent=1 // pred_check
      _
    $region19: #{tpu_custom_call.1} parent=1 // pred_check_branch
      %35 = sbr.rel (0) target = $region21
    $region20: #{tpu_custom_call.1} parent=1 // pred_region
      _
    $region21: #{tpu_custom_call.1} parent=1 // pred_fallthru
      _
    // Predicated region
    $region22: #{tpu_custom_call.1} parent=1 // pred_check
      _
    $region23: #{tpu_custom_call.1} parent=1 // pred_check_branch
      %37 = sbr.rel (0) target = $region25
    $region24: #{tpu_custom_call.1} parent=1 // pred_region
      _
    $region25: #{tpu_custom_call.1} parent=1 // pred_fallthru
      _
    // Predicated region
    $region26: #{tpu_custom_call.1} parent=1 // pred_check
      _
    $region27: #{tpu_custom_call.1} parent=1 // pred_check_branch
      %39 = sbr.rel (0) target = $region29
    $region28: #{tpu_custom_call.1} parent=1 // pred_region
      _
    $region29: #{tpu_custom_call.1} parent=1 // pred_fallthru
      _
    // Predicated region
    $region30: #{tpu_custom_call.1} parent=1 // pred_check
      _
    $region31: #{tpu_custom_call.1} parent=1 // pred_check_branch
      %41 = sbr.rel (0) target = $region33
    $region32: #{tpu_custom_call.1} parent=1 // pred_region
      _
    $region33: #{tpu_custom_call.1} parent=1 // pred_fallthru
      _
    // Predicated region
    $region34: #{tpu_custom_call.1} parent=1 // pred_check
      _
    $region35: #{tpu_custom_call.1} parent=1 // pred_check_branch
      %43 = sbr.rel (0) target = $region37
    $region36: #{tpu_custom_call.1} parent=1 // pred_region
      _
    $region37: #{tpu_custom_call.1} parent=1 // pred_fallthru
      _
    // Predicated region
    $region38: #{tpu_custom_call.1} parent=1 // pred_check
      _
    $region39: #{tpu_custom_call.1} parent=1 // pred_check_branch
      %45 = sbr.rel (0) target = $region41
    $region40: #{tpu_custom_call.1} parent=1 // pred_region
      %47 = dma.done [#allocation3], 256
    $region41: #{tpu_custom_call.1} parent=1 // pred_fallthru
      _
    %v48 = vld [vmem:[%s0] sm:$0xff]
    %v49 = vld [vmem:[%s0 + $0x8] sm:$0xff]
    %v50 = vld [vmem:[%s0 + $0x10] sm:$0xff]
    %v51 = vld [vmem:[#allocation2] sm:$0xff]
    %v52 = vld [vmem:[#allocation2 + $0x8] sm:$0xff]
    %v53 = vld [vmem:[%s2] sm:$0x1]
    %v55 = vperm.slane %v53, 0
    %vm57 = vcmask 130048
    %v59 = vsel %vm57, %v48, 0
    %v62 = vsel %vm57, %v49, 0
    %v65 = vsel %vm57, %v50, 0
    %67 = vmatpush.msra.mxu0 0.0
    %68 = vmatpush.msra.mxu0 0.0
    %69 = vmatpush.msra.mxu0 0.0
    %70 = vmatpush.msra.mxu0 0.0
    %71 = vmatpush.msra.mxu0 0.0
    %72 = vmatpush.msra.mxu0 0.0
    %73 = vmatpush.msra.mxu0 0.0
    %74 = vmatpush.msra.mxu0 0.0
    %75 = vmatpush.msra.mxu0 0.0
    %76 = vmatpush.msra.mxu0 0.0
    %77 = vmatpush.msra.mxu0 0.0
    %78 = vmatpush.msra.mxu0 0.0
    %79 = vmatpush.msra.mxu0 0.0
    %80 = vmatpush.msra.mxu0 0.0
    %81 = vmatpush.msra.mxu0 %v52
    %82 = vmatpush.msra.mxu0 %v51
    %83 = vmatmul.f32.gmra.mxu0 %v59
    %v84 = vpop.f32.mrf.mxu0
    %v85 = vadd.f32 %v55, %v84
    %86 = vmatmul.f32.gmra.mxu0 %v62
    %v87 = vpop.f32.mrf.mxu0
    %v88 = vadd.f32 %v55, %v87
    %89 = vmatmul.f32.gmra.mxu0 %v65
    %v90 = vpop.f32.mrf.mxu0
    %v91 = vadd.f32 %v55, %v90
    %92 = vdwg.mxu0
    %v93 = vmax.f32 %v85, 0.0
    %v94 = vmax.f32 %v88, 0.0
    %v95 = vmax.f32 %v91, 0.0
    %v96 = vld [vmem:[%s3] sm:$0xff]
    %v97 = vld [vmem:[%s3 + $0x8] sm:$0xff]
    %v98 = vld [vmem:[%s3 + $0x10] sm:$0xff]
    %v99 = vld [vmem:[%s3 + $0x18] sm:$0xff]
    %v100 = vld [vmem:[%s4] sm:$0x1]
    %v102 = vperm.slane %v100, 0
    %vm104 = vcmask 261120
    %v106 = vsel %vm104, %v93, 0
    %v109 = vsel %vm104, %v94, 0
    %v112 = vsel %vm104, %v95, 0
    %114 = vmatpush.msra.mxu0 0.0
    %115 = vmatpush.msra.mxu0 0.0
    %116 = vmatpush.msra.mxu0 0.0
    %117 = vmatpush.msra.mxu0 0.0
    %118 = vmatpush.msra.mxu0 0.0
    %119 = vmatpush.msra.mxu0 0.0
    %120 = vmatpush.msra.mxu0 0.0
    %121 = vmatpush.msra.mxu0 0.0
    %122 = vmatpush.msra.mxu0 0.0
    %123 = vmatpush.msra.mxu0 0.0
    %124 = vmatpush.msra.mxu0 0.0
    %125 = vmatpush.msra.mxu0 0.0
    %126 = vmatpush.msra.mxu0 %v99
    %127 = vmatpush.msra.mxu0 %v98
    %128 = vmatpush.msra.mxu0 %v97
    %129 = vmatpush.msra.mxu0 %v96
    %130 = vmatmul.f32.gmra.mxu0 %v106
    %v131 = vpop.f32.mrf.mxu0
    %v132 = vadd.f32 %v102, %v131
    %133 = vmatmul.f32.gmra.mxu0 %v109
    %v134 = vpop.f32.mrf.mxu0
    %v135 = vadd.f32 %v102, %v134
    %136 = vmatmul.f32.gmra.mxu0 %v112
    %v137 = vpop.f32.mrf.mxu0
    %v138 = vadd.f32 %v102, %v137
    %139 = vdwg.mxu0
    %v140 = vmax.f32 %v132, 0.0
    %v141 = vmax.f32 %v135, 0.0
    %v142 = vmax.f32 %v138, 0.0
    %v143 = vld [vmem:[%s5] sm:$0xff]
    %v144 = vld [vmem:[%s5 + $0x8] sm:$0xff]
    %v145 = vld [vmem:[%s5 + $0x10] sm:$0xff]
    %v146 = vld [vmem:[%s5 + $0x18] sm:$0xff]
    %v147 = vld [vmem:[%s6] sm:$0x1]
    %v149 = vperm.slane %v147, 0
    %v152 = vsel %vm104, %v140, 0
    %v155 = vsel %vm104, %v141, 0
    %v158 = vsel %vm104, %v142, 0
    %160 = vmatpush.msra.mxu0 0.0
    %161 = vmatpush.msra.mxu0 0.0
    %162 = vmatpush.msra.mxu0 0.0
    %163 = vmatpush.msra.mxu0 0.0
    %164 = vmatpush.msra.mxu0 0.0
    %165 = vmatpush.msra.mxu0 0.0
    %166 = vmatpush.msra.mxu0 0.0
    %167 = vmatpush.msra.mxu0 0.0
    %168 = vmatpush.msra.mxu0 0.0
    %169 = vmatpush.msra.mxu0 0.0
    %170 = vmatpush.msra.mxu0 0.0
    %171 = vmatpush.msra.mxu0 0.0
    %172 = vmatpush.msra.mxu0 %v146
    %173 = vmatpush.msra.mxu0 %v145
    %174 = vmatpush.msra.mxu0 %v144
    %175 = vmatpush.msra.mxu0 %v143
    %176 = vmatmul.f32.gmra.mxu0 %v152
    %v177 = vpop.f32.mrf.mxu0
    %v178 = vadd.f32 %v149, %v177
    %179 = vmatmul.f32.gmra.mxu0 %v155
    %v180 = vpop.f32.mrf.mxu0
    %v181 = vadd.f32 %v149, %v180
    %182 = vmatmul.f32.gmra.mxu0 %v158
    %v183 = vpop.f32.mrf.mxu0
    %v184 = vadd.f32 %v149, %v183
    %185 = vdwg.mxu0
    %v186 = vmax.f32 %v178, 0.0
    %v187 = vmax.f32 %v181, 0.0
    %v188 = vmax.f32 %v184, 0.0
    %v189 = vld [vmem:[%s7] sm:$0xff]
    %v190 = vld [vmem:[%s7 + $0x8] sm:$0xff]
    %v191 = vld [vmem:[%s7 + $0x10] sm:$0xff]
    %v192 = vld [vmem:[%s7 + $0x18] sm:$0xff]
    %v193 = vld [vmem:[%s8] sm:$0x1]
    %v195 = vperm.slane %v193, 0
    %v198 = vsel %vm104, %v186, 0
    %v201 = vsel %vm104, %v187, 0
    %v204 = vsel %vm104, %v188, 0
    %206 = vmatpush.msra.mxu0 0.0
    %207 = vmatpush.msra.mxu0 0.0
    %208 = vmatpush.msra.mxu0 0.0
    %209 = vmatpush.msra.mxu0 0.0
    %210 = vmatpush.msra.mxu0 0.0
    %211 = vmatpush.msra.mxu0 0.0
    %212 = vmatpush.msra.mxu0 0.0
    %213 = vmatpush.msra.mxu0 0.0
    %214 = vmatpush.msra.mxu0 0.0
    %215 = vmatpush.msra.mxu0 0.0
    %216 = vmatpush.msra.mxu0 0.0
    %217 = vmatpush.msra.mxu0 0.0
    %218 = vmatpush.msra.mxu0 %v192
    %219 = vmatpush.msra.mxu0 %v191
    %220 = vmatpush.msra.mxu0 %v190
    %221 = vmatpush.msra.mxu0 %v189
    %222 = vmatmul.f32.gmra.mxu0 %v198
    %v223 = vpop.f32.mrf.mxu0
    %v224 = vadd.f32 %v195, %v223
    %225 = vmatmul.f32.gmra.mxu0 %v201
    %v226 = vpop.f32.mrf.mxu0
    %v227 = vadd.f32 %v195, %v226
    %228 = vmatmul.f32.gmra.mxu0 %v204
    %v229 = vpop.f32.mrf.mxu0
    %v230 = vadd.f32 %v195, %v229
    %231 = vdwg.mxu0
    %v232 = vtanh.pop %v224
    %v233 = vtanh.pop %v227
    %v234 = vtanh.pop %v230
    %vm235 = vcmask 31744
    %236 = vst.msk [vmem:[%s9] sm:$0xff] %vm235, %v232
    %237 = vst.msk [vmem:[%s9 + $0x8] sm:$0xff] %vm235, %v233
    %238 = vst.msk [vmem:[%s9 + $0x10] sm:$0xff] %vm235, %v234
    // Predicated region
    $region42: #{tpu_custom_call.1} parent=1 // pred_check
      _
    $region43: #{tpu_custom_call.1} parent=1 // pred_check_branch
      %240 = sbr.rel (0) target = $region45
    $region44: #{tpu_custom_call.1} parent=1 // pred_region
      _
    $region45: #{tpu_custom_call.1} parent=1 // pred_fallthru
      _
    // Predicated region
    $region46: #{tpu_custom_call.1} parent=1 // pred_check
      _
    $region47: #{tpu_custom_call.1} parent=1 // pred_check_branch
      %242 = sbr.rel (0) target = $region49
    $region48: #{tpu_custom_call.1} parent=1 // pred_region
      _
    $region49: #{tpu_custom_call.1} parent=1 // pred_fallthru
      _
    %243 = vsyncpa [#allocation3], 1

</llo_original>
